<compile_context>
chip_gen: v6e
topology: v6e:2x2x1
jax: 0.10.0
libtpu: 0.0.40
codegen_flags: <defaults>
</compile_context>

<pallas_src>
import jax
import jax.numpy as jnp
from jax.experimental import pallas as pl
from jax.experimental.pallas import tpu as pltpu


def mlp_kernel(x_ref, w1_ref, b1_ref, w2_ref, b2_ref, w3_ref, b3_ref, o_ref):
    # x arrives as f32 (no wrapper cast); cast to bf16 on the VPU right before
    # the first MXU matmul.  Accumulation, bias add and ReLU stay in f32.
    x = x_ref[...].astype(jnp.bfloat16)
    h1 = jnp.dot(x, w1_ref[...], preferred_element_type=jnp.float32) + b1_ref[...]
    h1 = jnp.maximum(h1, 0.0).astype(jnp.bfloat16)
    h2 = jnp.dot(h1, w2_ref[...], preferred_element_type=jnp.float32) + b2_ref[...]
    h2 = jnp.maximum(h2, 0.0).astype(jnp.bfloat16)
    out = jnp.dot(h2, w3_ref[...], preferred_element_type=jnp.float32) + b3_ref[...]
    o_ref[...] = out.astype(o_ref.dtype)


def _round_up(n, m):
    return ((n + m - 1) // m) * m


def _choose_tile_b(B):
    # Sublane-aligned (multiple of 8) batch tile, capped at 2048 rows.
    # For B <= 8 use the full batch as a single (legal) full-extent block.
    # For larger B, target >= 2 grid steps so the "parallel" axis can be
    # sharded across both TensorCores on v7x (harmless on v5e/v6e).
    if B <= 8:
        return B
    return min(2048, _round_up(pl.cdiv(B, 2), 8))


def prepare_params(params, pad_hidden_to=128):
    """One-time preprocessing (hoist out of the per-step forward path):
    cast weights to bf16 and zero-pad the first hidden dim (64 -> 128) so the
    h1 activation / layer-2 K-dim are lane-dense.  Zero padding is exact."""
    w1, b1, w2, b2, w3, b3 = params
    h1 = w1.shape[1]
    if h1 < pad_hidden_to:
        pad = pad_hidden_to - h1
        w1 = jnp.pad(w1, ((0, 0), (0, pad)))
        b1 = jnp.pad(b1, ((0, 0), (0, pad)))
        w2 = jnp.pad(w2, ((0, pad), (0, 0)))
    return (w1.astype(jnp.bfloat16), b1.astype(jnp.float32),
            w2.astype(jnp.bfloat16), b2.astype(jnp.float32),
            w3.astype(jnp.bfloat16), b3.astype(jnp.float32))


def net_forward(state_nchw, kernel_params):
    """state_nchw: [B, 3, H, W] float32. kernel_params from prepare_params().
    Returns [B, output_dim] float32."""
    w1, b1, w2, b2, w3, b3 = kernel_params
    B = state_nchw.shape[0]
    x = state_nchw.reshape(B, -1)          # nn.Flatten; contiguous -> free, stays f32
    d_in = x.shape[1]
    h1 = w1.shape[1]
    h2 = w2.shape[1]
    d_out = w3.shape[1]

    tile_b = _choose_tile_b(B)
    n_tiles = pl.cdiv(B, tile_b)           # Pallas masks the partial boundary block

    const = lambda i: (0, 0)               # weights/biases stay VMEM-resident across the grid

    out = pl.pallas_call(
        mlp_kernel,
        out_shape=jax.ShapeDtypeStruct((B, d_out), jnp.float32),
        grid=(n_tiles,),
        in_specs=[
            pl.BlockSpec((tile_b, d_in), lambda i: (i, 0)),   # x streams over batch
            pl.BlockSpec((d_in, h1), const),
            pl.BlockSpec((1, h1), const),
            pl.BlockSpec((h1, h2), const),
            pl.BlockSpec((1, h2), const),
            pl.BlockSpec((h2, d_out), const),
            pl.BlockSpec((1, d_out), const),
        ],
        out_specs=pl.BlockSpec((tile_b, d_out), lambda i: (i, 0)),
        compiler_params=pltpu.CompilerParams(
            dimension_semantics=("parallel",),  # shard batch tiles across TCs on v7x
        ),
    )(x, w1, b1, w2, b2, w3, b3)
    return out


def init_params(key, input_dim, output_dim):
    """Deterministic init mimicking nn.Linear (uniform +/- 1/sqrt(fan_in))."""
    d_in = input_dim * input_dim * 3
    dims = [(d_in, 64), (64, 128), (128, output_dim)]
    params = []
    for (fi, fo) in dims:
        key, kw, kb = jax.random.split(key, 3)
        bound = 1.0 / jnp.sqrt(fi)
        w = jax.random.uniform(kw, (fi, fo), jnp.float32, -bound, bound)
        b = jax.random.uniform(kb, (1, fo), jnp.float32, -bound, bound)
        params += [w, b]
    return tuple(params)


def reference_forward(state_nchw, params):
    """Plain-JAX reference (original unpadded params) with the same
    bf16-operand / f32-accumulate recipe as the kernel."""
    w1, b1, w2, b2, w3, b3 = params
    x = state_nchw.reshape(state_nchw.shape[0], -1).astype(jnp.bfloat16)
    h1 = jnp.dot(x, w1.astype(jnp.bfloat16), preferred_element_type=jnp.float32) + b1
    h1 = jnp.maximum(h1, 0.0).astype(jnp.bfloat16)
    h2 = jnp.dot(h1, w2.astype(jnp.bfloat16), preferred_element_type=jnp.float32) + b2
    h2 = jnp.maximum(h2, 0.0).astype(jnp.bfloat16)
    return jnp.dot(h2, w3.astype(jnp.bfloat16), preferred_element_type=jnp.float32) + b3


if __name__ == "__main__":
    input_dim = 8       # board side -> flattened dim = 8*8*3 = 192
    output_dim = 4      # number of actions
    batch = 2

    key = jax.random.PRNGKey(0)
    key, kx = jax.random.split(key)
    state = jax.random.normal(kx, (batch, 3, input_dim, input_dim), jnp.float32)

    params = init_params(jax.random.PRNGKey(0), input_dim, output_dim)
    kernel_params = prepare_params(params)   # one-time: bf16 + lane-dense hidden pad

    # Small demo batch (B=2 -> single full-extent block).
    out = jax.block_until_ready(net_forward(state, kernel_params))
    ref = reference_forward(state, params)
    assert out.shape == (batch, output_dim)
    assert jnp.allclose(out, ref, atol=1e-3, rtol=1e-3)

    # Larger, non-tile-aligned batch: exercises multi-tile pipelining, resident
    # weights, and the masked partial boundary block (B=1000, tile_b=504).
    key, kx2 = jax.random.split(key)
    big_state = jax.random.normal(kx2, (1000, 3, input_dim, input_dim), jnp.float32)
    big_out = jax.block_until_ready(net_forward(big_state, kernel_params))
    big_ref = reference_forward(big_state, params)
    assert big_out.shape == (1000, output_dim)
    assert jnp.allclose(big_out, big_ref, atol=1e-3, rtol=1e-3)

    print("KERNEL_OK")
</pallas_src>

<mosaic_0001>
module attributes {stable_mosaic.version = 11 : i64} {
  func.func @mlp_kernel(%arg0: i32, %arg1: memref<2x192xf32, #tpu.memory_space<vmem>>, %arg2: memref<192x128xbf16, #tpu.memory_space<vmem>>, %arg3: memref<1x128xf32, #tpu.memory_space<vmem>>, %arg4: memref<128x128xbf16, #tpu.memory_space<vmem>>, %arg5: memref<1x128xf32, #tpu.memory_space<vmem>>, %arg6: memref<128x4xbf16, #tpu.memory_space<vmem>>, %arg7: memref<1x4xf32, #tpu.memory_space<vmem>>, %arg8: memref<2x4xf32, #tpu.memory_space<vmem>>) attributes {dimension_semantics = [#tpu.dimension_semantics<parallel>], iteration_bounds = array<i64: 1>, scalar_prefetch = 0 : i64, scratch_operands = 0 : i64, tpu.core_type = #tpu.core_type<tc>, window_params = [{transform_indices = @transform_0, window_bounds = array<i64: 2, 192>}, {pipeline_mode = #tpu.pipeline_mode<synchronous>, transform_indices = @transform_1, window_bounds = array<i64: 192, 128>}, {pipeline_mode = #tpu.pipeline_mode<synchronous>, transform_indices = @transform_2, window_bounds = array<i64: 1, 128>}, {pipeline_mode = #tpu.pipeline_mode<synchronous>, transform_indices = @transform_3, window_bounds = array<i64: 128, 128>}, {pipeline_mode = #tpu.pipeline_mode<synchronous>, transform_indices = @transform_4, window_bounds = array<i64: 1, 128>}, {pipeline_mode = #tpu.pipeline_mode<synchronous>, transform_indices = @transform_5, window_bounds = array<i64: 128, 4>}, {pipeline_mode = #tpu.pipeline_mode<synchronous>, transform_indices = @transform_6, window_bounds = array<i64: 1, 4>}, {transform_indices = @transform_7, window_bounds = array<i64: 2, 4>}]} {
    %c0 = arith.constant 0 : index
    %c0_0 = arith.constant 0 : index
    %0 = vector.load %arg1[%c0, %c0_0] : memref<2x192xf32, #tpu.memory_space<vmem>>, vector<2x192xf32>
    %1 = arith.truncf %0 : vector<2x192xf32> to vector<2x192xbf16>
    %c0_1 = arith.constant 0 : index
    %c0_2 = arith.constant 0 : index
    %2 = vector.load %arg2[%c0_1, %c0_2] : memref<192x128xbf16, #tpu.memory_space<vmem>>, vector<192x128xbf16>
    %cst = arith.constant dense<0.000000e+00> : vector<2x128xf32>
    %3 = tpu.matmul %1, %2, %cst {dimension_numbers = #tpu.dot_dimension_numbers<[1], [0], [0], [1], [0, 0, 1, 1], [], []>} : vector<2x192xbf16>, vector<192x128xbf16>, vector<2x128xf32> -> vector<2x128xf32>
    %c0_3 = arith.constant 0 : index
    %c0_4 = arith.constant 0 : index
    %4 = vector.load %arg3[%c0_3, %c0_4] : memref<1x128xf32, #tpu.memory_space<vmem>>, vector<1x128xf32>
    %5 = vector.broadcast %4 : vector<1x128xf32> to vector<2x128xf32>
    %6 = arith.addf %3, %5 : vector<2x128xf32>
    %cst_5 = arith.constant 0.000000e+00 : f32
    %7 = vector.broadcast %cst_5 : f32 to vector<2x128xf32>
    %8 = arith.maximumf %6, %7 : vector<2x128xf32>
    %9 = arith.truncf %8 : vector<2x128xf32> to vector<2x128xbf16>
    %c0_6 = arith.constant 0 : index
    %c0_7 = arith.constant 0 : index
    %10 = vector.load %arg4[%c0_6, %c0_7] : memref<128x128xbf16, #tpu.memory_space<vmem>>, vector<128x128xbf16>
    %cst_8 = arith.constant dense<0.000000e+00> : vector<2x128xf32>
    %11 = tpu.matmul %9, %10, %cst_8 {dimension_numbers = #tpu.dot_dimension_numbers<[1], [0], [0], [1], [0, 0, 1, 1], [], []>} : vector<2x128xbf16>, vector<128x128xbf16>, vector<2x128xf32> -> vector<2x128xf32>
    %c0_9 = arith.constant 0 : index
    %c0_10 = arith.constant 0 : index
    %12 = vector.load %arg5[%c0_9, %c0_10] : memref<1x128xf32, #tpu.memory_space<vmem>>, vector<1x128xf32>
    %13 = vector.broadcast %12 : vector<1x128xf32> to vector<2x128xf32>
    %14 = arith.addf %11, %13 : vector<2x128xf32>
    %cst_11 = arith.constant 0.000000e+00 : f32
    %15 = vector.broadcast %cst_11 : f32 to vector<2x128xf32>
    %16 = arith.maximumf %14, %15 : vector<2x128xf32>
    %17 = arith.truncf %16 : vector<2x128xf32> to vector<2x128xbf16>
    %c0_12 = arith.constant 0 : index
    %c0_13 = arith.constant 0 : index
    %18 = vector.load %arg6[%c0_12, %c0_13] : memref<128x4xbf16, #tpu.memory_space<vmem>>, vector<128x4xbf16>
    %cst_14 = arith.constant dense<0.000000e+00> : vector<2x4xf32>
    %19 = tpu.matmul %17, %18, %cst_14 {dimension_numbers = #tpu.dot_dimension_numbers<[1], [0], [0], [1], [0, 0, 1, 1], [], []>} : vector<2x128xbf16>, vector<128x4xbf16>, vector<2x4xf32> -> vector<2x4xf32>
    %c0_15 = arith.constant 0 : index
    %c0_16 = arith.constant 0 : index
    %20 = vector.load %arg7[%c0_15, %c0_16] : memref<1x4xf32, #tpu.memory_space<vmem>>, vector<1x4xf32>
    %21 = vector.broadcast %20 : vector<1x4xf32> to vector<2x4xf32>
    %22 = arith.addf %19, %21 : vector<2x4xf32>
    %c0_17 = arith.constant 0 : index
    %c0_18 = arith.constant 0 : index
    %23 = vector.load %arg8[%c0_17, %c0_18] : memref<2x4xf32, #tpu.memory_space<vmem>>, vector<2x4xf32>
    tpu.vector_store %arg8[%c0_17, %c0_18], %22 {strides = array<i32>} : memref<2x4xf32, #tpu.memory_space<vmem>>, vector<2x4xf32>,
    return
  }
  func.func @transform_0(%arg0: i32) -> (i32, i32) {
    %c0_i32 = arith.constant 0 : i32
    %c0_i32_0 = arith.constant 0 : i32
    return %arg0, %c0_i32 : i32, i32
  }
  func.func @transform_1(%arg0: i32) -> (i32, i32) {
    %c0_i32 = arith.constant 0 : i32
    %c0_i32_0 = arith.constant 0 : i32
    %c0_i32_1 = arith.constant 0 : i32
    return %c0_i32, %c0_i32_0 : i32, i32
  }
  func.func @transform_2(%arg0: i32) -> (i32, i32) {
    %c0_i32 = arith.constant 0 : i32
    %c0_i32_0 = arith.constant 0 : i32
    %c0_i32_1 = arith.constant 0 : i32
    return %c0_i32, %c0_i32_0 : i32, i32
  }
  func.func @transform_3(%arg0: i32) -> (i32, i32) {
    %c0_i32 = arith.constant 0 : i32
    %c0_i32_0 = arith.constant 0 : i32
    %c0_i32_1 = arith.constant 0 : i32
    return %c0_i32, %c0_i32_0 : i32, i32
  }
  func.func @transform_4(%arg0: i32) -> (i32, i32) {
    %c0_i32 = arith.constant 0 : i32
    %c0_i32_0 = arith.constant 0 : i32
    %c0_i32_1 = arith.constant 0 : i32
    return %c0_i32, %c0_i32_0 : i32, i32
  }
  func.func @transform_5(%arg0: i32) -> (i32, i32) {
    %c0_i32 = arith.constant 0 : i32
    %c0_i32_0 = arith.constant 0 : i32
    %c0_i32_1 = arith.constant 0 : i32
    return %c0_i32, %c0_i32_0 : i32, i32
  }
  func.func @transform_6(%arg0: i32) -> (i32, i32) {
    %c0_i32 = arith.constant 0 : i32
    %c0_i32_0 = arith.constant 0 : i32
    %c0_i32_1 = arith.constant 0 : i32
    return %c0_i32, %c0_i32_0 : i32, i32
  }
  func.func @transform_7(%arg0: i32) -> (i32, i32) {
    %c0_i32 = arith.constant 0 : i32
    %c0_i32_0 = arith.constant 0 : i32
    return %arg0, %c0_i32 : i32, i32
  }
}

</mosaic_0001>

<llo_original>
// kernel: tpu_custom_call.1
$region0: #{tpu_custom_call.1}
  #allocation0 [shape = 'u32[]', space=smem, size = 0x4, offset = 0x4, fixed_abs, tag = 'smem constant byte address 0x4 - core index']
  #allocation1 [shape = 'u32[144,128]{1,0:T(1,128)}', space=vmem, size = 0x12000, scoped, tag = 'internal scratch']
  %s0 = inlined_call_operand.vmem [shape: f32[2,192], index: 0, kind: input, shape index: {}]
  %s1 = inlined_call_operand.hbm [shape: bf16[192,128], index: 1, kind: input, shape index: {}]
  %s2 = inlined_call_operand.vmem [shape: f32[1,128], index: 2, kind: input, shape index: {}]
  %s3 = inlined_call_operand.vmem [shape: bf16[128,128], index: 3, kind: input, shape index: {}]
  %s4 = inlined_call_operand.vmem [shape: f32[1,128], index: 4, kind: input, shape index: {}]
  %s5 = inlined_call_operand.vmem [shape: bf16[128,4], index: 5, kind: input, shape index: {}]
  %s6 = inlined_call_operand.vmem [shape: f32[1,4], index: 6, kind: input, shape index: {}]
  %s7 = inlined_call_operand.hbm [shape: f32[2,4], index: 7, kind: output, shape index: {}]
  %s8 = sld [smem:[#allocation0]]
  $region42: #{tpu_custom_call.1} parent=0
    _
  %s10 = ssub.s32 1, %s8
  %s11 = scalar_select 0, %s10, %s8
  $region1: #{tpu_custom_call.1} parent=0
    #allocation2 [shape = 'u8[49152]{0}', space=vmem, size = 0xc000, scoped, tag = 'input window, operand 1, single buffered']
    #allocation3 [shape = 's32[1]{0}', space=sflag, size = 0x4, scoped, tag = 'scoped memory for tpu_custom_call.1']
    #allocation4 [shape = 's32[1]{0}', space=sflag, size = 0x4, scoped, tag = 'scoped memory for tpu_custom_call.1']
    #allocation5 [shape = 'u8[1024]{0}', space=vmem, size = 0x400, scoped, tag = 'output window, operand 0, single buffered']
    %12 = vsyncpa [#allocation3], 0
    %13 = vsyncpa [#allocation4], 0
    // Predicated region
    $region2: #{tpu_custom_call.1} parent=1 // pred_check
      _
    $region3: #{tpu_custom_call.1} parent=1 // pred_check_branch
      %15 = sbr.rel (0) target = $region5
    $region4: #{tpu_custom_call.1} parent=1 // pred_region
      _
    $region5: #{tpu_custom_call.1} parent=1 // pred_fallthru
      _
    // Predicated region
    $region6: #{tpu_custom_call.1} parent=1 // pred_check
      _
    $region7: #{tpu_custom_call.1} parent=1 // pred_check_branch
      %17 = sbr.rel (0) target = $region9
    $region8: #{tpu_custom_call.1} parent=1 // pred_region
      %s19 = ssub.s32 1536, 1536
      %20 = vsyncadd [#allocation3], %s19
      %s21 = sshll.u32 [#allocation2], 4
      %s22 = int_to_ptr.vmem [resolvable:$true] %s21
      %27 = dma.hbm_to_vmem [thread:$0]  %s1, 1536, %s22, [#allocation3], 64, 64, 4
    $region9: #{tpu_custom_call.1} parent=1 // pred_fallthru
      _
    // Predicated region
    $region10: #{tpu_custom_call.1} parent=1 // pred_check
      _
    $region11: #{tpu_custom_call.1} parent=1 // pred_check_branch
      %29 = sbr.rel (0) target = $region13
    $region12: #{tpu_custom_call.1} parent=1 // pred_region
      _
    $region13: #{tpu_custom_call.1} parent=1 // pred_fallthru
      _
    // Predicated region
    $region14: #{tpu_custom_call.1} parent=1 // pred_check
      _
    $region15: #{tpu_custom_call.1} parent=1 // pred_check_branch
      %31 = sbr.rel (0) target = $region17
    $region16: #{tpu_custom_call.1} parent=1 // pred_region
      _
    $region17: #{tpu_custom_call.1} parent=1 // pred_fallthru
      _
    // Predicated region
    $region18: #{tpu_custom_call.1} parent=1 // pred_check
      _
    $region19: #{tpu_custom_call.1} parent=1 // pred_check_branch
      %33 = sbr.rel (0) target = $region21
    $region20: #{tpu_custom_call.1} parent=1 // pred_region
      _
    $region21: #{tpu_custom_call.1} parent=1 // pred_fallthru
      _
    // Predicated region
    $region22: #{tpu_custom_call.1} parent=1 // pred_check
      _
    $region23: #{tpu_custom_call.1} parent=1 // pred_check_branch
      %35 = sbr.rel (0) target = $region25
    $region24: #{tpu_custom_call.1} parent=1 // pred_region
      _
    $region25: #{tpu_custom_call.1} parent=1 // pred_fallthru
      _
    // Predicated region
    $region26: #{tpu_custom_call.1} parent=1 // pred_check
      _
    $region27: #{tpu_custom_call.1} parent=1 // pred_check_branch
      %37 = sbr.rel (0) target = $region29
    $region28: #{tpu_custom_call.1} parent=1 // pred_region
      _
    $region29: #{tpu_custom_call.1} parent=1 // pred_fallthru
      _
    // Predicated region
    $region30: #{tpu_custom_call.1} parent=1 // pred_check
      _
    $region31: #{tpu_custom_call.1} parent=1 // pred_check_branch
      %39 = sbr.rel (0) target = $region33
    $region32: #{tpu_custom_call.1} parent=1 // pred_region
      %40 = dma.done [#allocation3], 1536
    $region33: #{tpu_custom_call.1} parent=1 // pred_fallthru
      _
    %v42 = vld [vmem:[%s0] sm:$0xf]
    %v45 = vunpack.c.l.s4 1983009808
    %v46 = vunpack.c.0.s8 %v45
    %v47 = vlaneseq
    %v48 = vshrl.u32 %v47, 7
    %v49 = vsub.s32 %v46, %v48
    %v50 = vrot.slane %v42, %v49
    %v51 = vcombine.high %v50, %v50
    %v54 = vpack.c.bf16 %v50, %v50
    %v55 = vpack.c.bf16 %v51, %v51
    %v56 = vld [vmem:[#allocation2] sm:$0xf]
    %v57 = vld [vmem:[#allocation2 + $0x4] sm:$0xf]
    %v58 = vld [vmem:[#allocation2 + $0x8] sm:$0xf]
    %v59 = vld [vmem:[#allocation2 + $0xc] sm:$0xf]
    %v60 = vld [vmem:[#allocation2 + $0x10] sm:$0xf]
    %v61 = vld [vmem:[#allocation2 + $0x14] sm:$0xf]
    %v62 = vld [vmem:[#allocation2 + $0x18] sm:$0xf]
    %v63 = vld [vmem:[#allocation2 + $0x1c] sm:$0xf]
    %v64 = vld [vmem:[#allocation2 + $0x20] sm:$0xf]
    %v65 = vld [vmem:[#allocation2 + $0x24] sm:$0xf]
    %v66 = vld [vmem:[#allocation2 + $0x28] sm:$0xf]
    %v67 = vld [vmem:[#allocation2 + $0x2c] sm:$0xf]
    %v68 = vld [vmem:[#allocation2 + $0x30] sm:$0xf]
    %v69 = vld [vmem:[#allocation2 + $0x34] sm:$0xf]
    %v70 = vld [vmem:[#allocation2 + $0x38] sm:$0xf]
    %v71 = vld [vmem:[#allocation2 + $0x3c] sm:$0xf]
    %v72 = vld [vmem:[#allocation2 + $0x40] sm:$0xf]
    %v73 = vld [vmem:[#allocation2 + $0x44] sm:$0xf]
    %v74 = vld [vmem:[#allocation2 + $0x48] sm:$0xf]
    %v75 = vld [vmem:[#allocation2 + $0x4c] sm:$0xf]
    %v76 = vld [vmem:[#allocation2 + $0x50] sm:$0xf]
    %v77 = vld [vmem:[#allocation2 + $0x54] sm:$0xf]
    %v78 = vld [vmem:[#allocation2 + $0x58] sm:$0xf]
    %v79 = vld [vmem:[#allocation2 + $0x5c] sm:$0xf]
    %v80 = vld [vmem:[%s2] sm:$0x1]
    %v82 = vlaneseq
    %v83 = vshrl.u32 %v82, 7
    %v84 = vsub.s32 0, %v83
    %v85 = vrot.slane %v80, %v84
    %v111 = vunpack.c.l.b16 %v56
    %v112 = vunpack.c.l.b16 %v57
    %v113 = vunpack.c.l.b16 %v58
    %v114 = vunpack.c.l.b16 %v59
    %v115 = vunpack.c.l.b16 %v60
    %v116 = vunpack.c.l.b16 %v61
    %v117 = vunpack.c.l.b16 %v62
    %v118 = vunpack.c.l.b16 %v63
    %v119 = vunpack.c.l.b16 %v64
    %v120 = vunpack.c.l.b16 %v65
    %v121 = vunpack.c.l.b16 %v66
    %v122 = vunpack.c.l.b16 %v67
    %v123 = vunpack.c.l.b16 %v68
    %v124 = vunpack.c.l.b16 %v69
    %v125 = vunpack.c.l.b16 %v70
    %v126 = vunpack.c.l.b16 %v71
    %v127 = vunpack.c.l.b16 %v72
    %v128 = vunpack.c.l.b16 %v73
    %v129 = vunpack.c.l.b16 %v74
    %v130 = vunpack.c.l.b16 %v75
    %v131 = vunpack.c.l.b16 %v76
    %v132 = vunpack.c.l.b16 %v77
    %v133 = vunpack.c.l.b16 %v78
    %v134 = vunpack.c.l.b16 %v79
    %v135 = vpack.c.b16 %v112, %v111
    %v136 = vpack.c.b16 %v114, %v113
    %v137 = vpack.c.b16 %v116, %v115
    %v138 = vpack.c.b16 %v118, %v117
    %v139 = vpack.c.b16 %v120, %v119
    %v140 = vpack.c.b16 %v122, %v121
    %v141 = vpack.c.b16 %v124, %v123
    %v142 = vpack.c.b16 %v126, %v125
    %v143 = vpack.c.b16 %v128, %v127
    %v144 = vpack.c.b16 %v130, %v129
    %v145 = vpack.c.b16 %v132, %v131
    %v146 = vpack.c.b16 %v134, %v133
    %vm159 = vcmask 523264
    %v161 = vsel %vm159, %v55, 0
    %163 = vmatprep.subr.bf16.mxu0 0
    %164 = vmatpush1.bf16.msra.mxu0 %v142
    %165 = vmatprep.subr.bf16.mxu0 0
    %166 = vmatpush1.bf16.msra.mxu0 %v141
    %167 = vmatprep.subr.bf16.mxu0 0
    %168 = vmatpush1.bf16.msra.mxu0 %v140
    %169 = vmatprep.subr.bf16.mxu0 0
    %170 = vmatpush1.bf16.msra.mxu0 %v139
    %171 = vmatprep.subr.bf16.mxu0 0
    %172 = vmatpush1.bf16.msra.mxu0 %v138
    %173 = vmatprep.subr.bf16.mxu0 0
    %174 = vmatpush1.bf16.msra.mxu0 %v137
    %175 = vmatprep.subr.bf16.mxu0 0
    %176 = vmatpush1.bf16.msra.mxu0 %v136
    %177 = vmatprep.subr.bf16.mxu0 0
    %178 = vmatpush1.bf16.msra.mxu0 %v135
    %179 = vmatprep.subr.bf16.mxu0 0
    %180 = vmatpush2.bf16.msra.mxu0 0
    %181 = vmatprep.subr.bf16.mxu0 0
    %182 = vmatpush2.bf16.msra.mxu0 0
    %183 = vmatprep.subr.bf16.mxu0 0
    %184 = vmatpush2.bf16.msra.mxu0 0
    %185 = vmatprep.subr.bf16.mxu0 0
    %186 = vmatpush2.bf16.msra.mxu0 0
    %187 = vmatprep.subr.bf16.mxu0 0
    %188 = vmatpush2.bf16.msra.mxu0 %v146
    %189 = vmatprep.subr.bf16.mxu0 0
    %190 = vmatpush2.bf16.msra.mxu0 %v145
    %191 = vmatprep.subr.bf16.mxu0 0
    %192 = vmatpush2.bf16.msra.mxu0 %v144
    %193 = vmatprep.subr.bf16.mxu0 0
    %194 = vmatpush2.bf16.msra.mxu0 %v143
    %195 = vmatprep.mubr.bf16.mxu0 %v161
    %196 = vmatmul.mubr.bf16.gmra.mxu0 %v54
    %v197 = vpop.f32.mrf.mxu0
    %v198 = vadd.f32 %v85, %v197
    %v199 = vpop.f32.mrf.mxu0
    %v200 = vpop.f32.mrf.mxu0
    %v201 = vpop.f32.mrf.mxu0
    %202 = vdwg.mxu0
    %v203 = vmax.f32 %v198, 0.0
    %v204 = vpack.c.bf16 %v203, %v203
    %v205 = vld [vmem:[%s3] sm:$0xf]
    %v206 = vld [vmem:[%s3 + $0x4] sm:$0xf]
    %v207 = vld [vmem:[%s3 + $0x8] sm:$0xf]
    %v208 = vld [vmem:[%s3 + $0xc] sm:$0xf]
    %v209 = vld [vmem:[%s3 + $0x10] sm:$0xf]
    %v210 = vld [vmem:[%s3 + $0x14] sm:$0xf]
    %v211 = vld [vmem:[%s3 + $0x18] sm:$0xf]
    %v212 = vld [vmem:[%s3 + $0x1c] sm:$0xf]
    %v213 = vld [vmem:[%s3 + $0x20] sm:$0xf]
    %v214 = vld [vmem:[%s3 + $0x24] sm:$0xf]
    %v215 = vld [vmem:[%s3 + $0x28] sm:$0xf]
    %v216 = vld [vmem:[%s3 + $0x2c] sm:$0xf]
    %v217 = vld [vmem:[%s3 + $0x30] sm:$0xf]
    %v218 = vld [vmem:[%s3 + $0x34] sm:$0xf]
    %v219 = vld [vmem:[%s3 + $0x38] sm:$0xf]
    %v220 = vld [vmem:[%s3 + $0x3c] sm:$0xf]
    %v221 = vld [vmem:[%s4] sm:$0x1]
    %v223 = vlaneseq
    %v224 = vshrl.u32 %v223, 7
    %v225 = vsub.s32 0, %v224
    %v226 = vrot.slane %v221, %v225
    %v244 = vunpack.c.l.b16 %v205
    %v245 = vunpack.c.l.b16 %v206
    %v246 = vunpack.c.l.b16 %v207
    %v247 = vunpack.c.l.b16 %v208
    %v248 = vunpack.c.l.b16 %v209
    %v249 = vunpack.c.l.b16 %v210
    %v250 = vunpack.c.l.b16 %v211
    %v251 = vunpack.c.l.b16 %v212
    %v252 = vunpack.c.l.b16 %v213
    %v253 = vunpack.c.l.b16 %v214
    %v254 = vunpack.c.l.b16 %v215
    %v255 = vunpack.c.l.b16 %v216
    %v256 = vunpack.c.l.b16 %v217
    %v257 = vunpack.c.l.b16 %v218
    %v258 = vunpack.c.l.b16 %v219
    %v259 = vunpack.c.l.b16 %v220
    %v260 = vpack.c.b16 %v245, %v244
    %v261 = vpack.c.b16 %v247, %v246
    %v262 = vpack.c.b16 %v249, %v248
    %v263 = vpack.c.b16 %v251, %v250
    %v264 = vpack.c.b16 %v253, %v252
    %v265 = vpack.c.b16 %v255, %v254
    %v266 = vpack.c.b16 %v257, %v256
    %v267 = vpack.c.b16 %v259, %v258
    %276 = vmatprep.subr.bf16.mxu0 0
    %277 = vmatpush1.bf16.msra.mxu0 %v267
    %278 = vmatprep.subr.bf16.mxu0 0
    %279 = vmatpush1.bf16.msra.mxu0 %v266
    %280 = vmatprep.subr.bf16.mxu0 0
    %281 = vmatpush1.bf16.msra.mxu0 %v265
    %282 = vmatprep.subr.bf16.mxu0 0
    %283 = vmatpush1.bf16.msra.mxu0 %v264
    %284 = vmatprep.subr.bf16.mxu0 0
    %285 = vmatpush1.bf16.msra.mxu0 %v263
    %286 = vmatprep.subr.bf16.mxu0 0
    %287 = vmatpush1.bf16.msra.mxu0 %v262
    %288 = vmatprep.subr.bf16.mxu0 0
    %289 = vmatpush1.bf16.msra.mxu0 %v261
    %290 = vmatprep.subr.bf16.mxu0 0
    %291 = vmatpush1.bf16.msra.mxu0 %v260
    %292 = vmatprep.subr.bf16.mxu0 0
    %293 = vmatpush2.bf16.msra.mxu0 0
    %294 = vmatprep.subr.bf16.mxu0 0
    %295 = vmatpush2.bf16.msra.mxu0 0
    %296 = vmatprep.subr.bf16.mxu0 0
    %297 = vmatpush2.bf16.msra.mxu0 0
    %298 = vmatprep.subr.bf16.mxu0 0
    %299 = vmatpush2.bf16.msra.mxu0 0
    %300 = vmatprep.subr.bf16.mxu0 0
    %301 = vmatpush2.bf16.msra.mxu0 0
    %302 = vmatprep.subr.bf16.mxu0 0
    %303 = vmatpush2.bf16.msra.mxu0 0
    %304 = vmatprep.subr.bf16.mxu0 0
    %305 = vmatpush2.bf16.msra.mxu0 0
    %306 = vmatprep.subr.bf16.mxu0 0
    %307 = vmatpush2.bf16.msra.mxu0 0
    %308 = vmatprep.mubr.bf16.mxu0 0
    %309 = vmatmul.mubr.bf16.gmra.mxu0 %v204
    %v310 = vpop.f32.mrf.mxu0
    %v311 = vadd.f32 %v226, %v310
    %v312 = vpop.f32.mrf.mxu0
    %v313 = vpop.f32.mrf.mxu0
    %v314 = vpop.f32.mrf.mxu0
    %315 = vdwg.mxu0
    %v316 = vmax.f32 %v311, 0.0
    %v317 = vpack.c.bf16 %v316, %v316
    %v318 = vld [vmem:[%s5] sm:$0xf]
    %v319 = vld [vmem:[%s5 + $0x4] sm:$0xf]
    %v320 = vld [vmem:[%s5 + $0x8] sm:$0xf]
    %v321 = vld [vmem:[%s5 + $0xc] sm:$0xf]
    %v322 = vld [vmem:[%s5 + $0x10] sm:$0xf]
    %v323 = vld [vmem:[%s5 + $0x14] sm:$0xf]
    %v324 = vld [vmem:[%s5 + $0x18] sm:$0xf]
    %v325 = vld [vmem:[%s5 + $0x1c] sm:$0xf]
    %v326 = vld [vmem:[%s5 + $0x20] sm:$0xf]
    %v327 = vld [vmem:[%s5 + $0x24] sm:$0xf]
    %v328 = vld [vmem:[%s5 + $0x28] sm:$0xf]
    %v329 = vld [vmem:[%s5 + $0x2c] sm:$0xf]
    %v330 = vld [vmem:[%s5 + $0x30] sm:$0xf]
    %v331 = vld [vmem:[%s5 + $0x34] sm:$0xf]
    %v332 = vld [vmem:[%s5 + $0x38] sm:$0xf]
    %v333 = vld [vmem:[%s5 + $0x3c] sm:$0xf]
    %v334 = vld [vmem:[%s6] sm:$0x1]
    %v336 = vlaneseq
    %v337 = vshrl.u32 %v336, 7
    %v338 = vsub.s32 0, %v337
    %v339 = vrot.slane %v334, %v338
    %v357 = vunpack.c.l.b16 %v318
    %v358 = vunpack.c.l.b16 %v319
    %v359 = vunpack.c.l.b16 %v320
    %v360 = vunpack.c.l.b16 %v321
    %v361 = vunpack.c.l.b16 %v322
    %v362 = vunpack.c.l.b16 %v323
    %v363 = vunpack.c.l.b16 %v324
    %v364 = vunpack.c.l.b16 %v325
    %v365 = vunpack.c.l.b16 %v326
    %v366 = vunpack.c.l.b16 %v327
    %v367 = vunpack.c.l.b16 %v328
    %v368 = vunpack.c.l.b16 %v329
    %v369 = vunpack.c.l.b16 %v330
    %v370 = vunpack.c.l.b16 %v331
    %v371 = vunpack.c.l.b16 %v332
    %v372 = vunpack.c.l.b16 %v333
    %v373 = vpack.c.b16 %v358, %v357
    %v374 = vpack.c.b16 %v360, %v359
    %v375 = vpack.c.b16 %v362, %v361
    %v376 = vpack.c.b16 %v364, %v363
    %v377 = vpack.c.b16 %v366, %v365
    %v378 = vpack.c.b16 %v368, %v367
    %v379 = vpack.c.b16 %v370, %v369
    %v380 = vpack.c.b16 %v372, %v371
    %389 = vmatprep.subr.bf16.mxu0 0
    %390 = vmatpush1.bf16.msra.mxu0 %v380
    %391 = vmatprep.subr.bf16.mxu0 0
    %392 = vmatpush1.bf16.msra.mxu0 %v379
    %393 = vmatprep.subr.bf16.mxu0 0
    %394 = vmatpush1.bf16.msra.mxu0 %v378
    %395 = vmatprep.subr.bf16.mxu0 0
    %396 = vmatpush1.bf16.msra.mxu0 %v377
    %397 = vmatprep.subr.bf16.mxu0 0
    %398 = vmatpush1.bf16.msra.mxu0 %v376
    %399 = vmatprep.subr.bf16.mxu0 0
    %400 = vmatpush1.bf16.msra.mxu0 %v375
    %401 = vmatprep.subr.bf16.mxu0 0
    %402 = vmatpush1.bf16.msra.mxu0 %v374
    %403 = vmatprep.subr.bf16.mxu0 0
    %404 = vmatpush1.bf16.msra.mxu0 %v373
    %405 = vmatprep.subr.bf16.mxu0 0
    %406 = vmatpush2.bf16.msra.mxu0 0
    %407 = vmatprep.subr.bf16.mxu0 0
    %408 = vmatpush2.bf16.msra.mxu0 0
    %409 = vmatprep.subr.bf16.mxu0 0
    %410 = vmatpush2.bf16.msra.mxu0 0
    %411 = vmatprep.subr.bf16.mxu0 0
    %412 = vmatpush2.bf16.msra.mxu0 0
    %413 = vmatprep.subr.bf16.mxu0 0
    %414 = vmatpush2.bf16.msra.mxu0 0
    %415 = vmatprep.subr.bf16.mxu0 0
    %416 = vmatpush2.bf16.msra.mxu0 0
    %417 = vmatprep.subr.bf16.mxu0 0
    %418 = vmatpush2.bf16.msra.mxu0 0
    %419 = vmatprep.subr.bf16.mxu0 0
    %420 = vmatpush2.bf16.msra.mxu0 0
    %421 = vmatprep.mubr.bf16.mxu0 0
    %422 = vmatmul.mubr.bf16.gmra.mxu0 %v317
    %v423 = vpop.f32.mrf.mxu0
    %v424 = vadd.f32 %v339, %v423
    %v425 = vpop.f32.mrf.mxu0
    %v426 = vpop.f32.mrf.mxu0
    %v427 = vpop.f32.mrf.mxu0
    %428 = vdwg.mxu0
    %vm429 = vcmask 25600
    %430 = vst.msk [vmem:[#allocation5] sm:$0x3] %vm429, %v424
    // Predicated region
    $region34: #{tpu_custom_call.1} parent=1 // pred_check
      _
    $region35: #{tpu_custom_call.1} parent=1 // pred_check_branch
      %432 = sbr.rel (0) target = $region37
    $region36: #{tpu_custom_call.1} parent=1 // pred_region
      %s434 = ssub.s32 32, 32
      %435 = vsyncadd [#allocation4], %s434
      %s437 = sshll.u32 [#allocation5], 4
      %s438 = int_to_ptr.vmem [resolvable:$true] %s437
      %440 = dma.vmem_to_hbm [thread:$0]  %s438, 32, %s7, [#allocation4]
    $region37: #{tpu_custom_call.1} parent=1 // pred_fallthru
      _
    // Predicated region
    $region38: #{tpu_custom_call.1} parent=1 // pred_check
      _
    $region39: #{tpu_custom_call.1} parent=1 // pred_check_branch
      %442 = sbr.rel (0) target = $region41
    $region40: #{tpu_custom_call.1} parent=1 // pred_region
      %443 = dma.done [#allocation4], 32
    $region41: #{tpu_custom_call.1} parent=1 // pred_fallthru
      _
    %444 = vsyncpa [#allocation3], 1
    %445 = vsyncpa [#allocation4], 1

</llo_original>
